<compile_context>
chip_gen: v7x
topology: tpu7x:2x2x1
jax: 0.10.0
libtpu: 0.0.40
codegen_flags: <defaults>
</compile_context>

<pallas_src>
import functools

import jax
import jax.numpy as jnp
import numpy as np
from jax.experimental import pallas as pl
from jax.experimental.pallas import tpu as pltpu


# ----------------------------- Pallas kernel --------------------------------

def _decoder_kernel(x_ref, wih_ref, whh_ref, b_ref, wfc_ref, bfc_ref,
                    out_ref, *, batch, seq, hidden):
    """Full-sequence LSTM + fused FC projection in one invocation.

    x_ref   : (T*B, E)   time-major flattened inputs
    wih_ref : (E, 4H)    fused input->hidden weights  (gate order i,f,g,o)
    whh_ref : (H, 4H)    fused hidden->hidden weights
    b_ref   : (1, 4H)    fused combined bias (b_ih + b_hh)
    wfc_ref : (H, V)     FC weights (PyTorch fc.weight^T)
    bfc_ref : (1, V)     FC bias
    out_ref : (T*B, V)   time-major flattened logits
    """
    H = hidden
    x = x_ref[...]                                           # [T*B, E]

    # ---- Pre-pass: one fused, batched input projection with the bias folded
    # in.  Result is [T*B, 4H] = [16, 128]: 2 vregs, kept entirely in registers.
    gx = jnp.dot(x, wih_ref[...],
                 preferred_element_type=jnp.float32) + b_ref[...]

    whh = whh_ref[...]                                       # [H, 4H], loaded once

    # ---- Serial recurrence: one lane-dense [B,H] @ [H,128] matmul per step.
    h = jnp.zeros((batch, H), jnp.float32)
    c = jnp.zeros((batch, H), jnp.float32)
    hs = []
    for t in range(seq):                                     # static unroll (T=8)
        gates = gx[t * batch:(t + 1) * batch] + jnp.dot(
            h, whh, preferred_element_type=jnp.float32)      # [B, 4H]
        # Whole-tile transcendentals (EUP slot has slack), then one static
        # lane slice per gate -- no per-gate masked VPU work in the loop.
        sg = jax.nn.sigmoid(gates)                           # [B, 4H]
        th = jnp.tanh(gates)                                 # [B, 4H]
        i_t = sg[:, 0 * H:1 * H]
        f_t = sg[:, 1 * H:2 * H]
        g_t = th[:, 2 * H:3 * H]
        o_t = sg[:, 3 * H:4 * H]
        c = f_t * c + i_t * g_t
        h = o_t * jnp.tanh(c)
        hs.append(h)

    # ---- Post-pass: one batched FC over all timesteps, lane-dense store.
    h_all = jnp.concatenate(hs, axis=0)                      # [T*B, H]
    logits = jnp.dot(h_all, wfc_ref[...],
                     preferred_element_type=jnp.float32) + bfc_ref[...]
    out_ref[...] = logits                                    # [T*B, V]


def lstm_fc_pallas(inputs_tbe, w_ih, w_hh, b, w_fc, b_fc):
    """inputs_tbe: [T, B, E] float32.  Returns logits [T, B, V] float32."""
    T, B, E = inputs_tbe.shape
    H = w_hh.shape[0]
    V = w_fc.shape[-1]

    x_flat = inputs_tbe.reshape(T * B, E)                    # time-major rows

    kernel = functools.partial(_decoder_kernel, batch=B, seq=T, hidden=H)

    grid_spec = pltpu.PrefetchScalarGridSpec(
        num_scalar_prefetch=0,
        grid=(1,),                                           # single invocation
        in_specs=[
            pl.BlockSpec((T * B, E), lambda i: (0, 0)),
            pl.BlockSpec((E, 4 * H), lambda i: (0, 0)),
            pl.BlockSpec((H, 4 * H), lambda i: (0, 0)),
            pl.BlockSpec((1, 4 * H), lambda i: (0, 0)),
            pl.BlockSpec((H, V), lambda i: (0, 0)),
            pl.BlockSpec((1, V), lambda i: (0, 0)),
        ],
        out_specs=pl.BlockSpec((T * B, V), lambda i: (0, 0)),
    )

    out = pl.pallas_call(
        kernel,
        out_shape=jax.ShapeDtypeStruct((T * B, V), jnp.float32),
        grid_spec=grid_spec,
        compiler_params=pltpu.CompilerParams(
            dimension_semantics=("arbitrary",)),
    )(x_flat, w_ih, w_hh, b, w_fc, b_fc)

    return out.reshape(T, B, V)


# ----------------------------- DecoderRNN wrapper ----------------------------

def init_decoder_params(key, embed_size, hidden_size, vocab_size):
    """Deterministic synthetic parameters (PyTorch-like uniform init),
    stored in fused gate layout: gates i,f,g,o concatenated on the last axis."""
    ks = jax.random.split(key, 7)
    bound = 1.0 / np.sqrt(hidden_size)
    u = lambda k, shape, bnd: jax.random.uniform(k, shape, jnp.float32, -bnd, bnd)
    params = {
        "embed": jax.random.normal(ks[0], (vocab_size, embed_size), jnp.float32),
        # fused, already transposed relative to PyTorch: [in, 4H]
        "w_ih": u(ks[1], (embed_size, 4 * hidden_size), bound),
        "w_hh": u(ks[2], (hidden_size, 4 * hidden_size), bound),
        "b_lstm": u(ks[3], (1, 4 * hidden_size), bound)
                  + u(ks[4], (1, 4 * hidden_size), bound),    # b_ih + b_hh
        "w_fc": u(ks[5], (hidden_size, vocab_size), bound),
        "b_fc": u(ks[6], (1, vocab_size), bound),
    }
    return params


@jax.jit
def decoder_forward(params, features, captions):
    """features: [B, E] float32, captions: [B, Tcap] int32 -> [B, Tcap, V]."""
    # Embedding lookup (glue) of captions[:, :-1].
    emb = jnp.take(params["embed"], captions[:, :-1], axis=0)      # [B, Tcap-1, E]
    # Concat image features as the first timestep.
    inputs = jnp.concatenate([features[:, None, :], emb], axis=1)  # [B, T, E]
    # Kernel runs time-major; this transpose is tiny ([T,B,E]).
    inputs_tbe = jnp.transpose(inputs, (1, 0, 2))                  # [T, B, E]
    logits_tbv = lstm_fc_pallas(inputs_tbe, params["w_ih"], params["w_hh"],
                                params["b_lstm"], params["w_fc"], params["b_fc"])
    return jnp.transpose(logits_tbv, (1, 0, 2))                    # [B, T, V]


# ----------------------------- pure-JAX reference ----------------------------

def decoder_forward_ref(params, features, captions):
    emb = jnp.take(params["embed"], captions[:, :-1], axis=0)
    inputs = jnp.concatenate([features[:, None, :], emb], axis=1)  # [B, T, E]
    B, T, E = inputs.shape
    H = params["w_hh"].shape[0]
    w_ih, w_hh, b = params["w_ih"], params["w_hh"], params["b_lstm"]

    def step(carry, x_t):
        h, c = carry
        gates = x_t @ w_ih + h @ w_hh + b                          # [B, 4H]
        i = jax.nn.sigmoid(gates[:, 0 * H:1 * H])
        f = jax.nn.sigmoid(gates[:, 1 * H:2 * H])
        g = jnp.tanh(gates[:, 2 * H:3 * H])
        o = jax.nn.sigmoid(gates[:, 3 * H:4 * H])
        c_new = f * c + i * g
        h_new = o * jnp.tanh(c_new)
        return (h_new, c_new), h_new

    h0 = jnp.zeros((B, H), jnp.float32)
    c0 = jnp.zeros((B, H), jnp.float32)
    _, hs = jax.lax.scan(step, (h0, c0), jnp.transpose(inputs, (1, 0, 2)))
    hs = jnp.transpose(hs, (1, 0, 2))                              # [B, T, H]
    return hs @ params["w_fc"] + params["b_fc"][0]


# ---------------------------------- main -------------------------------------

if __name__ == "__main__":
    B = 2            # batch
    E = 32           # embed_size
    H = 32           # hidden_size  (4H = 128 -> lane-dense fused gates)
    V = 128          # vocab_size
    T_CAP = 8        # caption length (forward: features + captions[:, :-1] -> T = 8)

    key = jax.random.PRNGKey(0)
    k_params, k_feat, k_cap = jax.random.split(key, 3)

    params = init_decoder_params(k_params, E, H, V)
    features = jax.random.normal(k_feat, (B, E), jnp.float32)
    captions = jax.random.randint(k_cap, (B, T_CAP), 0, V, dtype=jnp.int32)

    out = decoder_forward(params, features, captions)
    out = jax.block_until_ready(out)

    ref = decoder_forward_ref(params, features, captions)
    assert out.shape == (B, T_CAP, V)
    np.testing.assert_allclose(np.asarray(out), np.asarray(ref),
                               rtol=1e-4, atol=1e-4)

    # TODO(synk): DecoderRNN.sample() (host-side greedy argmax loop) is not
    # implemented as a kernel; it is sequential host control flow.
    print("KERNEL_OK")
</pallas_src>

<mosaic_0001>
module attributes {stable_mosaic.version = 11 : i64} {
  func.func @_decoder_kernel(%arg0: i32, %arg1: memref<16x32xf32, #tpu.memory_space<vmem>>, %arg2: memref<32x128xf32, #tpu.memory_space<vmem>>, %arg3: memref<32x128xf32, #tpu.memory_space<vmem>>, %arg4: memref<1x128xf32, #tpu.memory_space<vmem>>, %arg5: memref<32x128xf32, #tpu.memory_space<vmem>>, %arg6: memref<1x128xf32, #tpu.memory_space<vmem>>, %arg7: memref<16x128xf32, #tpu.memory_space<vmem>>) attributes {dimension_semantics = [#tpu.dimension_semantics<arbitrary>], iteration_bounds = array<i64: 1>, scalar_prefetch = 0 : i64, scratch_operands = 0 : i64, tpu.core_type = #tpu.core_type<tc>, window_params = [{pipeline_mode = #tpu.pipeline_mode<synchronous>, transform_indices = @transform_0, window_bounds = array<i64: 16, 32>}, {pipeline_mode = #tpu.pipeline_mode<synchronous>, transform_indices = @transform_1, window_bounds = array<i64: 32, 128>}, {pipeline_mode = #tpu.pipeline_mode<synchronous>, transform_indices = @transform_2, window_bounds = array<i64: 32, 128>}, {pipeline_mode = #tpu.pipeline_mode<synchronous>, transform_indices = @transform_3, window_bounds = array<i64: 1, 128>}, {pipeline_mode = #tpu.pipeline_mode<synchronous>, transform_indices = @transform_4, window_bounds = array<i64: 32, 128>}, {pipeline_mode = #tpu.pipeline_mode<synchronous>, transform_indices = @transform_5, window_bounds = array<i64: 1, 128>}, {pipeline_mode = #tpu.pipeline_mode<synchronous>, transform_indices = @transform_6, window_bounds = array<i64: 16, 128>}]} {
    %c0 = arith.constant 0 : index
    %c0_0 = arith.constant 0 : index
    %0 = vector.load %arg1[%c0, %c0_0] : memref<16x32xf32, #tpu.memory_space<vmem>>, vector<16x32xf32>
    %c0_1 = arith.constant 0 : index
    %c0_2 = arith.constant 0 : index
    %1 = vector.load %arg2[%c0_1, %c0_2] : memref<32x128xf32, #tpu.memory_space<vmem>>, vector<32x128xf32>
    %cst = arith.constant dense<0.000000e+00> : vector<16x128xf32>
    %2 = tpu.matmul %0, %1, %cst {dimension_numbers = #tpu.dot_dimension_numbers<[1], [0], [0], [1], [0, 0, 1, 1], [], []>} : vector<16x32xf32>, vector<32x128xf32>, vector<16x128xf32> -> vector<16x128xf32>
    %c0_3 = arith.constant 0 : index
    %c0_4 = arith.constant 0 : index
    %3 = vector.load %arg4[%c0_3, %c0_4] : memref<1x128xf32, #tpu.memory_space<vmem>>, vector<1x128xf32>
    %4 = vector.broadcast %3 : vector<1x128xf32> to vector<16x128xf32>
    %5 = arith.addf %2, %4 : vector<16x128xf32>
    %c0_5 = arith.constant 0 : index
    %c0_6 = arith.constant 0 : index
    %6 = vector.load %arg3[%c0_5, %c0_6] : memref<32x128xf32, #tpu.memory_space<vmem>>, vector<32x128xf32>
    %cst_7 = arith.constant 0.000000e+00 : f32
    %7 = vector.broadcast %cst_7 : f32 to vector<2x32xf32>
    %cst_8 = arith.constant 0.000000e+00 : f32
    %8 = vector.broadcast %cst_8 : f32 to vector<2x32xf32>
    %9 = vector.extract_strided_slice %5 {offsets = [0, 0], sizes = [2, 128], strides = [1, 1]} : vector<16x128xf32> to vector<2x128xf32>
    %cst_9 = arith.constant dense<0.000000e+00> : vector<2x128xf32>
    %10 = tpu.matmul %7, %6, %cst_9 {dimension_numbers = #tpu.dot_dimension_numbers<[1], [0], [0], [1], [0, 0, 1, 1], [], []>} : vector<2x32xf32>, vector<32x128xf32>, vector<2x128xf32> -> vector<2x128xf32>
    %11 = arith.addf %9, %10 : vector<2x128xf32>
    %12 = arith.negf %11 : vector<2x128xf32>
    %13 = math.exp %12 : vector<2x128xf32>
    %cst_10 = arith.constant 1.000000e+00 : f32
    %14 = vector.broadcast %cst_10 : f32 to vector<2x128xf32>
    %15 = arith.addf %14, %13 : vector<2x128xf32>
    %16 = arith.divf %14, %15 : vector<2x128xf32>
    %17 = math.tanh %11 : vector<2x128xf32>
    %18 = vector.extract_strided_slice %16 {offsets = [0, 0], sizes = [2, 32], strides = [1, 1]} : vector<2x128xf32> to vector<2x32xf32>
    %19 = vector.extract_strided_slice %16 {offsets = [0, 32], sizes = [2, 32], strides = [1, 1]} : vector<2x128xf32> to vector<2x32xf32>
    %20 = vector.extract_strided_slice %17 {offsets = [0, 64], sizes = [2, 32], strides = [1, 1]} : vector<2x128xf32> to vector<2x32xf32>
    %21 = vector.extract_strided_slice %16 {offsets = [0, 96], sizes = [2, 32], strides = [1, 1]} : vector<2x128xf32> to vector<2x32xf32>
    %22 = arith.mulf %19, %8 : vector<2x32xf32>
    %23 = arith.mulf %18, %20 : vector<2x32xf32>
    %24 = arith.addf %22, %23 : vector<2x32xf32>
    %25 = math.tanh %24 : vector<2x32xf32>
    %26 = arith.mulf %21, %25 : vector<2x32xf32>
    %27 = vector.extract_strided_slice %5 {offsets = [2, 0], sizes = [2, 128], strides = [1, 1]} : vector<16x128xf32> to vector<2x128xf32>
    %cst_11 = arith.constant dense<0.000000e+00> : vector<2x128xf32>
    %28 = tpu.matmul %26, %6, %cst_11 {dimension_numbers = #tpu.dot_dimension_numbers<[1], [0], [0], [1], [0, 0, 1, 1], [], []>} : vector<2x32xf32>, vector<32x128xf32>, vector<2x128xf32> -> vector<2x128xf32>
    %29 = arith.addf %27, %28 : vector<2x128xf32>
    %30 = arith.negf %29 : vector<2x128xf32>
    %31 = math.exp %30 : vector<2x128xf32>
    %cst_12 = arith.constant 1.000000e+00 : f32
    %32 = vector.broadcast %cst_12 : f32 to vector<2x128xf32>
    %33 = arith.addf %32, %31 : vector<2x128xf32>
    %34 = arith.divf %32, %33 : vector<2x128xf32>
    %35 = math.tanh %29 : vector<2x128xf32>
    %36 = vector.extract_strided_slice %34 {offsets = [0, 0], sizes = [2, 32], strides = [1, 1]} : vector<2x128xf32> to vector<2x32xf32>
    %37 = vector.extract_strided_slice %34 {offsets = [0, 32], sizes = [2, 32], strides = [1, 1]} : vector<2x128xf32> to vector<2x32xf32>
    %38 = vector.extract_strided_slice %35 {offsets = [0, 64], sizes = [2, 32], strides = [1, 1]} : vector<2x128xf32> to vector<2x32xf32>
    %39 = vector.extract_strided_slice %34 {offsets = [0, 96], sizes = [2, 32], strides = [1, 1]} : vector<2x128xf32> to vector<2x32xf32>
    %40 = arith.mulf %37, %24 : vector<2x32xf32>
    %41 = arith.mulf %36, %38 : vector<2x32xf32>
    %42 = arith.addf %40, %41 : vector<2x32xf32>
    %43 = math.tanh %42 : vector<2x32xf32>
    %44 = arith.mulf %39, %43 : vector<2x32xf32>
    %45 = vector.extract_strided_slice %5 {offsets = [4, 0], sizes = [2, 128], strides = [1, 1]} : vector<16x128xf32> to vector<2x128xf32>
    %cst_13 = arith.constant dense<0.000000e+00> : vector<2x128xf32>
    %46 = tpu.matmul %44, %6, %cst_13 {dimension_numbers = #tpu.dot_dimension_numbers<[1], [0], [0], [1], [0, 0, 1, 1], [], []>} : vector<2x32xf32>, vector<32x128xf32>, vector<2x128xf32> -> vector<2x128xf32>
    %47 = arith.addf %45, %46 : vector<2x128xf32>
    %48 = arith.negf %47 : vector<2x128xf32>
    %49 = math.exp %48 : vector<2x128xf32>
    %cst_14 = arith.constant 1.000000e+00 : f32
    %50 = vector.broadcast %cst_14 : f32 to vector<2x128xf32>
    %51 = arith.addf %50, %49 : vector<2x128xf32>
    %52 = arith.divf %50, %51 : vector<2x128xf32>
    %53 = math.tanh %47 : vector<2x128xf32>
    %54 = vector.extract_strided_slice %52 {offsets = [0, 0], sizes = [2, 32], strides = [1, 1]} : vector<2x128xf32> to vector<2x32xf32>
    %55 = vector.extract_strided_slice %52 {offsets = [0, 32], sizes = [2, 32], strides = [1, 1]} : vector<2x128xf32> to vector<2x32xf32>
    %56 = vector.extract_strided_slice %53 {offsets = [0, 64], sizes = [2, 32], strides = [1, 1]} : vector<2x128xf32> to vector<2x32xf32>
    %57 = vector.extract_strided_slice %52 {offsets = [0, 96], sizes = [2, 32], strides = [1, 1]} : vector<2x128xf32> to vector<2x32xf32>
    %58 = arith.mulf %55, %42 : vector<2x32xf32>
    %59 = arith.mulf %54, %56 : vector<2x32xf32>
    %60 = arith.addf %58, %59 : vector<2x32xf32>
    %61 = math.tanh %60 : vector<2x32xf32>
    %62 = arith.mulf %57, %61 : vector<2x32xf32>
    %63 = vector.extract_strided_slice %5 {offsets = [6, 0], sizes = [2, 128], strides = [1, 1]} : vector<16x128xf32> to vector<2x128xf32>
    %cst_15 = arith.constant dense<0.000000e+00> : vector<2x128xf32>
    %64 = tpu.matmul %62, %6, %cst_15 {dimension_numbers = #tpu.dot_dimension_numbers<[1], [0], [0], [1], [0, 0, 1, 1], [], []>} : vector<2x32xf32>, vector<32x128xf32>, vector<2x128xf32> -> vector<2x128xf32>
    %65 = arith.addf %63, %64 : vector<2x128xf32>
    %66 = arith.negf %65 : vector<2x128xf32>
    %67 = math.exp %66 : vector<2x128xf32>
    %cst_16 = arith.constant 1.000000e+00 : f32
    %68 = vector.broadcast %cst_16 : f32 to vector<2x128xf32>
    %69 = arith.addf %68, %67 : vector<2x128xf32>
    %70 = arith.divf %68, %69 : vector<2x128xf32>
    %71 = math.tanh %65 : vector<2x128xf32>
    %72 = vector.extract_strided_slice %70 {offsets = [0, 0], sizes = [2, 32], strides = [1, 1]} : vector<2x128xf32> to vector<2x32xf32>
    %73 = vector.extract_strided_slice %70 {offsets = [0, 32], sizes = [2, 32], strides = [1, 1]} : vector<2x128xf32> to vector<2x32xf32>
    %74 = vector.extract_strided_slice %71 {offsets = [0, 64], sizes = [2, 32], strides = [1, 1]} : vector<2x128xf32> to vector<2x32xf32>
    %75 = vector.extract_strided_slice %70 {offsets = [0, 96], sizes = [2, 32], strides = [1, 1]} : vector<2x128xf32> to vector<2x32xf32>
    %76 = arith.mulf %73, %60 : vector<2x32xf32>
    %77 = arith.mulf %72, %74 : vector<2x32xf32>
    %78 = arith.addf %76, %77 : vector<2x32xf32>
    %79 = math.tanh %78 : vector<2x32xf32>
    %80 = arith.mulf %75, %79 : vector<2x32xf32>
    %81 = vector.extract_strided_slice %5 {offsets = [8, 0], sizes = [2, 128], strides = [1, 1]} : vector<16x128xf32> to vector<2x128xf32>
    %cst_17 = arith.constant dense<0.000000e+00> : vector<2x128xf32>
    %82 = tpu.matmul %80, %6, %cst_17 {dimension_numbers = #tpu.dot_dimension_numbers<[1], [0], [0], [1], [0, 0, 1, 1], [], []>} : vector<2x32xf32>, vector<32x128xf32>, vector<2x128xf32> -> vector<2x128xf32>
    %83 = arith.addf %81, %82 : vector<2x128xf32>
    %84 = arith.negf %83 : vector<2x128xf32>
    %85 = math.exp %84 : vector<2x128xf32>
    %cst_18 = arith.constant 1.000000e+00 : f32
    %86 = vector.broadcast %cst_18 : f32 to vector<2x128xf32>
    %87 = arith.addf %86, %85 : vector<2x128xf32>
    %88 = arith.divf %86, %87 : vector<2x128xf32>
    %89 = math.tanh %83 : vector<2x128xf32>
    %90 = vector.extract_strided_slice %88 {offsets = [0, 0], sizes = [2, 32], strides = [1, 1]} : vector<2x128xf32> to vector<2x32xf32>
    %91 = vector.extract_strided_slice %88 {offsets = [0, 32], sizes = [2, 32], strides = [1, 1]} : vector<2x128xf32> to vector<2x32xf32>
    %92 = vector.extract_strided_slice %89 {offsets = [0, 64], sizes = [2, 32], strides = [1, 1]} : vector<2x128xf32> to vector<2x32xf32>
    %93 = vector.extract_strided_slice %88 {offsets = [0, 96], sizes = [2, 32], strides = [1, 1]} : vector<2x128xf32> to vector<2x32xf32>
    %94 = arith.mulf %91, %78 : vector<2x32xf32>
    %95 = arith.mulf %90, %92 : vector<2x32xf32>
    %96 = arith.addf %94, %95 : vector<2x32xf32>
    %97 = math.tanh %96 : vector<2x32xf32>
    %98 = arith.mulf %93, %97 : vector<2x32xf32>
    %99 = vector.extract_strided_slice %5 {offsets = [10, 0], sizes = [2, 128], strides = [1, 1]} : vector<16x128xf32> to vector<2x128xf32>
    %cst_19 = arith.constant dense<0.000000e+00> : vector<2x128xf32>
    %100 = tpu.matmul %98, %6, %cst_19 {dimension_numbers = #tpu.dot_dimension_numbers<[1], [0], [0], [1], [0, 0, 1, 1], [], []>} : vector<2x32xf32>, vector<32x128xf32>, vector<2x128xf32> -> vector<2x128xf32>
    %101 = arith.addf %99, %100 : vector<2x128xf32>
    %102 = arith.negf %101 : vector<2x128xf32>
    %103 = math.exp %102 : vector<2x128xf32>
    %cst_20 = arith.constant 1.000000e+00 : f32
    %104 = vector.broadcast %cst_20 : f32 to vector<2x128xf32>
    %105 = arith.addf %104, %103 : vector<2x128xf32>
    %106 = arith.divf %104, %105 : vector<2x128xf32>
    %107 = math.tanh %101 : vector<2x128xf32>
    %108 = vector.extract_strided_slice %106 {offsets = [0, 0], sizes = [2, 32], strides = [1, 1]} : vector<2x128xf32> to vector<2x32xf32>
    %109 = vector.extract_strided_slice %106 {offsets = [0, 32], sizes = [2, 32], strides = [1, 1]} : vector<2x128xf32> to vector<2x32xf32>
    %110 = vector.extract_strided_slice %107 {offsets = [0, 64], sizes = [2, 32], strides = [1, 1]} : vector<2x128xf32> to vector<2x32xf32>
    %111 = vector.extract_strided_slice %106 {offsets = [0, 96], sizes = [2, 32], strides = [1, 1]} : vector<2x128xf32> to vector<2x32xf32>
    %112 = arith.mulf %109, %96 : vector<2x32xf32>
    %113 = arith.mulf %108, %110 : vector<2x32xf32>
    %114 = arith.addf %112, %113 : vector<2x32xf32>
    %115 = math.tanh %114 : vector<2x32xf32>
    %116 = arith.mulf %111, %115 : vector<2x32xf32>
    %117 = vector.extract_strided_slice %5 {offsets = [12, 0], sizes = [2, 128], strides = [1, 1]} : vector<16x128xf32> to vector<2x128xf32>
    %cst_21 = arith.constant dense<0.000000e+00> : vector<2x128xf32>
    %118 = tpu.matmul %116, %6, %cst_21 {dimension_numbers = #tpu.dot_dimension_numbers<[1], [0], [0], [1], [0, 0, 1, 1], [], []>} : vector<2x32xf32>, vector<32x128xf32>, vector<2x128xf32> -> vector<2x128xf32>
    %119 = arith.addf %117, %118 : vector<2x128xf32>
    %120 = arith.negf %119 : vector<2x128xf32>
    %121 = math.exp %120 : vector<2x128xf32>
    %cst_22 = arith.constant 1.000000e+00 : f32
    %122 = vector.broadcast %cst_22 : f32 to vector<2x128xf32>
    %123 = arith.addf %122, %121 : vector<2x128xf32>
    %124 = arith.divf %122, %123 : vector<2x128xf32>
    %125 = math.tanh %119 : vector<2x128xf32>
    %126 = vector.extract_strided_slice %124 {offsets = [0, 0], sizes = [2, 32], strides = [1, 1]} : vector<2x128xf32> to vector<2x32xf32>
    %127 = vector.extract_strided_slice %124 {offsets = [0, 32], sizes = [2, 32], strides = [1, 1]} : vector<2x128xf32> to vector<2x32xf32>
    %128 = vector.extract_strided_slice %125 {offsets = [0, 64], sizes = [2, 32], strides = [1, 1]} : vector<2x128xf32> to vector<2x32xf32>
    %129 = vector.extract_strided_slice %124 {offsets = [0, 96], sizes = [2, 32], strides = [1, 1]} : vector<2x128xf32> to vector<2x32xf32>
    %130 = arith.mulf %127, %114 : vector<2x32xf32>
    %131 = arith.mulf %126, %128 : vector<2x32xf32>
    %132 = arith.addf %130, %131 : vector<2x32xf32>
    %133 = math.tanh %132 : vector<2x32xf32>
    %134 = arith.mulf %129, %133 : vector<2x32xf32>
    %135 = vector.extract_strided_slice %5 {offsets = [14, 0], sizes = [2, 128], strides = [1, 1]} : vector<16x128xf32> to vector<2x128xf32>
    %cst_23 = arith.constant dense<0.000000e+00> : vector<2x128xf32>
    %136 = tpu.matmul %134, %6, %cst_23 {dimension_numbers = #tpu.dot_dimension_numbers<[1], [0], [0], [1], [0, 0, 1, 1], [], []>} : vector<2x32xf32>, vector<32x128xf32>, vector<2x128xf32> -> vector<2x128xf32>
    %137 = arith.addf %135, %136 : vector<2x128xf32>
    %138 = arith.negf %137 : vector<2x128xf32>
    %139 = math.exp %138 : vector<2x128xf32>
    %cst_24 = arith.constant 1.000000e+00 : f32
    %140 = vector.broadcast %cst_24 : f32 to vector<2x128xf32>
    %141 = arith.addf %140, %139 : vector<2x128xf32>
    %142 = arith.divf %140, %141 : vector<2x128xf32>
    %143 = math.tanh %137 : vector<2x128xf32>
    %144 = vector.extract_strided_slice %142 {offsets = [0, 0], sizes = [2, 32], strides = [1, 1]} : vector<2x128xf32> to vector<2x32xf32>
    %145 = vector.extract_strided_slice %142 {offsets = [0, 32], sizes = [2, 32], strides = [1, 1]} : vector<2x128xf32> to vector<2x32xf32>
    %146 = vector.extract_strided_slice %143 {offsets = [0, 64], sizes = [2, 32], strides = [1, 1]} : vector<2x128xf32> to vector<2x32xf32>
    %147 = vector.extract_strided_slice %142 {offsets = [0, 96], sizes = [2, 32], strides = [1, 1]} : vector<2x128xf32> to vector<2x32xf32>
    %148 = arith.mulf %145, %132 : vector<2x32xf32>
    %149 = arith.mulf %144, %146 : vector<2x32xf32>
    %150 = arith.addf %148, %149 : vector<2x32xf32>
    %151 = math.tanh %150 : vector<2x32xf32>
    %152 = arith.mulf %147, %151 : vector<2x32xf32>
    %153 = tpu.concatenate %26, %44, %62, %80, %98, %116, %134, %152 in 0 : vector<2x32xf32>, vector<2x32xf32>, vector<2x32xf32>, vector<2x32xf32>, vector<2x32xf32>, vector<2x32xf32>, vector<2x32xf32>, vector<2x32xf32> -> vector<16x32xf32>
    %c0_25 = arith.constant 0 : index
    %c0_26 = arith.constant 0 : index
    %154 = vector.load %arg5[%c0_25, %c0_26] : memref<32x128xf32, #tpu.memory_space<vmem>>, vector<32x128xf32>
    %cst_27 = arith.constant dense<0.000000e+00> : vector<16x128xf32>
    %155 = tpu.matmul %153, %154, %cst_27 {dimension_numbers = #tpu.dot_dimension_numbers<[1], [0], [0], [1], [0, 0, 1, 1], [], []>} : vector<16x32xf32>, vector<32x128xf32>, vector<16x128xf32> -> vector<16x128xf32>
    %c0_28 = arith.constant 0 : index
    %c0_29 = arith.constant 0 : index
    %156 = vector.load %arg6[%c0_28, %c0_29] : memref<1x128xf32, #tpu.memory_space<vmem>>, vector<1x128xf32>
    %157 = vector.broadcast %156 : vector<1x128xf32> to vector<16x128xf32>
    %158 = arith.addf %155, %157 : vector<16x128xf32>
    %c0_30 = arith.constant 0 : index
    %c0_31 = arith.constant 0 : index
    %159 = vector.load %arg7[%c0_30, %c0_31] : memref<16x128xf32, #tpu.memory_space<vmem>>, vector<16x128xf32>
    tpu.vector_store %arg7[%c0_30, %c0_31], %158 {strides = array<i32>} : memref<16x128xf32, #tpu.memory_space<vmem>>, vector<16x128xf32>,
    return
  }
  func.func @transform_0(%arg0: i32) -> (i32, i32) {
    %c0_i32 = arith.constant 0 : i32
    %c0_i32_0 = arith.constant 0 : i32
    %c0_i32_1 = arith.constant 0 : i32
    return %c0_i32, %c0_i32_0 : i32, i32
  }
  func.func @transform_1(%arg0: i32) -> (i32, i32) {
    %c0_i32 = arith.constant 0 : i32
    %c0_i32_0 = arith.constant 0 : i32
    %c0_i32_1 = arith.constant 0 : i32
    return %c0_i32, %c0_i32_0 : i32, i32
  }
  func.func @transform_2(%arg0: i32) -> (i32, i32) {
    %c0_i32 = arith.constant 0 : i32
    %c0_i32_0 = arith.constant 0 : i32
    %c0_i32_1 = arith.constant 0 : i32
    return %c0_i32, %c0_i32_0 : i32, i32
  }
  func.func @transform_3(%arg0: i32) -> (i32, i32) {
    %c0_i32 = arith.constant 0 : i32
    %c0_i32_0 = arith.constant 0 : i32
    %c0_i32_1 = arith.constant 0 : i32
    return %c0_i32, %c0_i32_0 : i32, i32
  }
  func.func @transform_4(%arg0: i32) -> (i32, i32) {
    %c0_i32 = arith.constant 0 : i32
    %c0_i32_0 = arith.constant 0 : i32
    %c0_i32_1 = arith.constant 0 : i32
    return %c0_i32, %c0_i32_0 : i32, i32
  }
  func.func @transform_5(%arg0: i32) -> (i32, i32) {
    %c0_i32 = arith.constant 0 : i32
    %c0_i32_0 = arith.constant 0 : i32
    %c0_i32_1 = arith.constant 0 : i32
    return %c0_i32, %c0_i32_0 : i32, i32
  }
  func.func @transform_6(%arg0: i32) -> (i32, i32) {
    %c0_i32 = arith.constant 0 : i32
    %c0_i32_0 = arith.constant 0 : i32
    %c0_i32_1 = arith.constant 0 : i32
    return %c0_i32, %c0_i32_0 : i32, i32
  }
}

</mosaic_0001>

<llo_original>
// kernel: decoder_forward.1
$region0: #{decoder_forward.1}
  #allocation0 [shape = 'u32[]', space=smem, size = 0x4, offset = 0x4, fixed_abs, tag = 'smem constant byte address 0x4 - core index']
  #allocation1 [shape = 'u32[144,128]{1,0:T(1,128)}', space=vmem, size = 0x12000, scoped, tag = 'internal scratch']
  %s0 = inlined_call_operand.vmem [shape: f32[16,32], index: 0, kind: input, shape index: {}]
  %s1 = inlined_call_operand.vmem [shape: f32[32,128], index: 1, kind: input, shape index: {}]
  %s2 = inlined_call_operand.vmem [shape: f32[32,128], index: 2, kind: input, shape index: {}]
  %s3 = inlined_call_operand.vmem [shape: f32[1,128], index: 3, kind: input, shape index: {}]
  %s4 = inlined_call_operand.vmem [shape: f32[32,128], index: 4, kind: input, shape index: {}]
  %s5 = inlined_call_operand.vmem [shape: f32[1,128], index: 5, kind: input, shape index: {}]
  %s6 = inlined_call_operand.vmem [shape: f32[16,128], index: 6, kind: output, shape index: {}]
  %s7 = sld [smem:[#allocation0]]
  $region34: #{decoder_forward.1} parent=0
    _
  %s9 = ssub.s32 1, %s7
  %s10 = scalar_select 0, %s9, %s7
  // Predicated region
  $region2: #{decoder_forward.1} parent=0 // pred_check
    _
  $region3: #{decoder_forward.1} parent=0 // pred_check_branch
    %12 = sbr.rel (0) target = $region5
  $region4: #{decoder_forward.1} parent=0 // pred_region
    _
  $region5: #{decoder_forward.1} parent=0 // pred_fallthru
    _
  // Predicated region
  $region6: #{decoder_forward.1} parent=0 // pred_check
    _
  $region7: #{decoder_forward.1} parent=0 // pred_check_branch
    %14 = sbr.rel (0) target = $region9
  $region8: #{decoder_forward.1} parent=0 // pred_region
    _
  $region9: #{decoder_forward.1} parent=0 // pred_fallthru
    _
  // Predicated region
  $region10: #{decoder_forward.1} parent=0 // pred_check
    _
  $region11: #{decoder_forward.1} parent=0 // pred_check_branch
    %16 = sbr.rel (0) target = $region13
  $region12: #{decoder_forward.1} parent=0 // pred_region
    _
  $region13: #{decoder_forward.1} parent=0 // pred_fallthru
    _
  // Predicated region
  $region14: #{decoder_forward.1} parent=0 // pred_check
    _
  $region15: #{decoder_forward.1} parent=0 // pred_check_branch
    %18 = sbr.rel (0) target = $region17
  $region16: #{decoder_forward.1} parent=0 // pred_region
    _
  $region17: #{decoder_forward.1} parent=0 // pred_fallthru
    _
  // Predicated region
  $region18: #{decoder_forward.1} parent=0 // pred_check
    _
  $region19: #{decoder_forward.1} parent=0 // pred_check_branch
    %20 = sbr.rel (0) target = $region21
  $region20: #{decoder_forward.1} parent=0 // pred_region
    _
  $region21: #{decoder_forward.1} parent=0 // pred_fallthru
    _
  // Predicated region
  $region22: #{decoder_forward.1} parent=0 // pred_check
    _
  $region23: #{decoder_forward.1} parent=0 // pred_check_branch
    %22 = sbr.rel (0) target = $region25
  $region24: #{decoder_forward.1} parent=0 // pred_region
    _
  $region25: #{decoder_forward.1} parent=0 // pred_fallthru
    _
  %v23 = vld [vmem:[%s0] sm:$0xff]
  %v24 = vld [vmem:[%s0 + $0x8] sm:$0xff]
  %v25 = vld [vmem:[%s1] sm:$0xff]
  %v26 = vld [vmem:[%s1 + $0x8] sm:$0xff]
  %v27 = vld [vmem:[%s1 + $0x10] sm:$0xff]
  %v28 = vld [vmem:[%s1 + $0x18] sm:$0xff]
  %v29 = vld [vmem:[%s3] sm:$0x1]
  %v31 = vlaneseq
  %v32 = vshrl.u32 %v31, 7
  %v33 = vsub.s32 0, %v32
  %v34 = vrot.slane %v29, %v33
  %vm36 = vcmask 261120
  %v38 = vsel %vm36, %v23, 0
  %v41 = vsel %vm36, %v24, 0
  %43 = vmatprep.subr.mxu0 0.0
  %44 = vmatpush1.msra.mxu0 %v25
  %45 = vmatprep.subr.mxu0 0.0
  %46 = vmatpush1.msra.mxu0 %v26
  %47 = vmatprep.subr.mxu0 0.0
  %48 = vmatpush1.msra.mxu0 %v27
  %49 = vmatprep.subr.mxu0 0.0
  %50 = vmatpush1.msra.mxu0 %v28
  %51 = vmatprep.subr.mxu0 0.0
  %52 = vmatpush1.msra.mxu0 0.0
  %53 = vmatprep.subr.mxu0 0.0
  %54 = vmatpush1.msra.mxu0 0.0
  %55 = vmatprep.subr.mxu0 0.0
  %56 = vmatpush1.msra.mxu0 0.0
  %57 = vmatprep.subr.mxu0 0.0
  %58 = vmatpush1.msra.mxu0 0.0
  %59 = vmatprep.subr.mxu0 0.0
  %60 = vmatpush1.msra.mxu0 0.0
  %61 = vmatprep.subr.mxu0 0.0
  %62 = vmatpush1.msra.mxu0 0.0
  %63 = vmatprep.subr.mxu0 0.0
  %64 = vmatpush1.msra.mxu0 0.0
  %65 = vmatprep.subr.mxu0 0.0
  %66 = vmatpush1.msra.mxu0 0.0
  %67 = vmatprep.subr.mxu0 0.0
  %68 = vmatpush1.msra.mxu0 0.0
  %69 = vmatprep.subr.mxu0 0.0
  %70 = vmatpush1.msra.mxu0 0.0
  %71 = vmatprep.subr.mxu0 0.0
  %72 = vmatpush1.msra.mxu0 0.0
  %73 = vmatprep.subr.mxu0 0.0
  %74 = vmatpush1.msra.mxu0 0.0
  %75 = vmatprep.subr.mxu0 0.0
  %76 = vmatpush1.msra.mxu0 0.0
  %77 = vmatprep.subr.mxu0 0.0
  %78 = vmatpush1.msra.mxu0 0.0
  %79 = vmatprep.subr.mxu0 0.0
  %80 = vmatpush1.msra.mxu0 0.0
  %81 = vmatprep.subr.mxu0 0.0
  %82 = vmatpush1.msra.mxu0 0.0
  %83 = vmatprep.subr.mxu0 0.0
  %84 = vmatpush1.msra.mxu0 0.0
  %85 = vmatprep.subr.mxu0 0.0
  %86 = vmatpush1.msra.mxu0 0.0
  %87 = vmatprep.subr.mxu0 0.0
  %88 = vmatpush1.msra.mxu0 0.0
  %89 = vmatprep.subr.mxu0 0.0
  %90 = vmatpush1.msra.mxu0 0.0
  %91 = vmatprep.subr.mxu0 0.0
  %92 = vmatpush1.msra.mxu0 0.0
  %93 = vmatprep.subr.mxu0 0.0
  %94 = vmatpush1.msra.mxu0 0.0
  %95 = vmatprep.subr.mxu0 0.0
  %96 = vmatpush1.msra.mxu0 0.0
  %97 = vmatprep.subr.mxu0 0.0
  %98 = vmatpush1.msra.mxu0 0.0
  %99 = vmatprep.subr.mxu0 0.0
  %100 = vmatpush1.msra.mxu0 0.0
  %101 = vmatprep.subr.mxu0 0.0
  %102 = vmatpush1.msra.mxu0 0.0
  %103 = vmatprep.subr.mxu0 0.0
  %104 = vmatpush1.msra.mxu0 0.0
  %105 = vmatprep.subr.mxu0 0.0
  %106 = vmatpush1.msra.mxu0 0.0
  %107 = vmatprep.mubr.f32.mxu0 0.0
  %108 = vmatmul.mubr.f32.gmra.mrb[0].mxu0 %v38
  %v109 = vpop.f32.mrb[0].mxu0
  %v110 = vadd.f32 %v34, %v109
  %v111 = vpop.f32.mrb[0].mxu0
  %112 = vmatprep.mubr.f32.mxu0 0.0
  %113 = vmatmul.mubr.f32.gmra.mrb[0].mxu0 %v41
  %v114 = vpop.f32.mrb[0].mxu0
  %v115 = vadd.f32 %v34, %v114
  %v116 = vpop.f32.mrb[0].mxu0
  %117 = vdwg.mxu0
  %v118 = vld [vmem:[%s2] sm:$0xff]
  %v119 = vld [vmem:[%s2 + $0x8] sm:$0xff]
  %v120 = vld [vmem:[%s2 + $0x10] sm:$0xff]
  %v121 = vld [vmem:[%s2 + $0x18] sm:$0xff]
  %v123 = vsel %vm36, 0.0, 0
  %125 = vmatprep.subr.mxu0 0.0
  %126 = vmatpush1.msra.mxu0 %v118
  %127 = vmatprep.subr.mxu0 0.0
  %128 = vmatpush1.msra.mxu0 %v119
  %129 = vmatprep.subr.mxu0 0.0
  %130 = vmatpush1.msra.mxu0 %v120
  %131 = vmatprep.subr.mxu0 0.0
  %132 = vmatpush1.msra.mxu0 %v121
  %133 = vmatprep.subr.mxu0 0.0
  %134 = vmatpush1.msra.mxu0 0.0
  %135 = vmatprep.subr.mxu0 0.0
  %136 = vmatpush1.msra.mxu0 0.0
  %137 = vmatprep.subr.mxu0 0.0
  %138 = vmatpush1.msra.mxu0 0.0
  %139 = vmatprep.subr.mxu0 0.0
  %140 = vmatpush1.msra.mxu0 0.0
  %141 = vmatprep.subr.mxu0 0.0
  %142 = vmatpush1.msra.mxu0 0.0
  %143 = vmatprep.subr.mxu0 0.0
  %144 = vmatpush1.msra.mxu0 0.0
  %145 = vmatprep.subr.mxu0 0.0
  %146 = vmatpush1.msra.mxu0 0.0
  %147 = vmatprep.subr.mxu0 0.0
  %148 = vmatpush1.msra.mxu0 0.0
  %149 = vmatprep.subr.mxu0 0.0
  %150 = vmatpush1.msra.mxu0 0.0
  %151 = vmatprep.subr.mxu0 0.0
  %152 = vmatpush1.msra.mxu0 0.0
  %153 = vmatprep.subr.mxu0 0.0
  %154 = vmatpush1.msra.mxu0 0.0
  %155 = vmatprep.subr.mxu0 0.0
  %156 = vmatpush1.msra.mxu0 0.0
  %157 = vmatprep.subr.mxu0 0.0
  %158 = vmatpush1.msra.mxu0 0.0
  %159 = vmatprep.subr.mxu0 0.0
  %160 = vmatpush1.msra.mxu0 0.0
  %161 = vmatprep.subr.mxu0 0.0
  %162 = vmatpush1.msra.mxu0 0.0
  %163 = vmatprep.subr.mxu0 0.0
  %164 = vmatpush1.msra.mxu0 0.0
  %165 = vmatprep.subr.mxu0 0.0
  %166 = vmatpush1.msra.mxu0 0.0
  %167 = vmatprep.subr.mxu0 0.0
  %168 = vmatpush1.msra.mxu0 0.0
  %169 = vmatprep.subr.mxu0 0.0
  %170 = vmatpush1.msra.mxu0 0.0
  %171 = vmatprep.subr.mxu0 0.0
  %172 = vmatpush1.msra.mxu0 0.0
  %173 = vmatprep.subr.mxu0 0.0
  %174 = vmatpush1.msra.mxu0 0.0
  %175 = vmatprep.subr.mxu0 0.0
  %176 = vmatpush1.msra.mxu0 0.0
  %177 = vmatprep.subr.mxu0 0.0
  %178 = vmatpush1.msra.mxu0 0.0
  %179 = vmatprep.subr.mxu0 0.0
  %180 = vmatpush1.msra.mxu0 0.0
  %181 = vmatprep.subr.mxu0 0.0
  %182 = vmatpush1.msra.mxu0 0.0
  %183 = vmatprep.subr.mxu0 0.0
  %184 = vmatpush1.msra.mxu0 0.0
  %185 = vmatprep.subr.mxu0 0.0
  %186 = vmatpush1.msra.mxu0 0.0
  %187 = vmatprep.subr.mxu0 0.0
  %188 = vmatpush1.msra.mxu0 0.0
  %189 = vmatprep.mubr.f32.mxu0 0.0
  %190 = vmatmul.mubr.f32.gmra.mrb[0].mxu0 %v123
  %v191 = vpop.f32.mrb[0].mxu0
  %v192 = vadd.f32 0.0, %v191
  %v193 = vpop.f32.mrb[0].mxu0
  %194 = vdwg.mxu0
  %v195 = vadd.f32 %v110, %v192
  %v196 = vxor.u32 %v195, 2147483648
  %v197 = vmul.f32 %v196, 1.442695
  %v198 = vpow.pop %v197
  %v199 = vadd.f32 %v198, 1.0
  %v200 = vrcp.pop %v199
  %v201 = vmul.f32 1.0, %v200
  %v202 = vtanh.pop %v195
  %v203 = vmul.f32 %v201, 0.0
  %205 = vrot.lane.b32.xlu0 %v202, 64
  %v206 = vpop.permute.xlu0 %205
  %v208 = vmul.f32 %v201, %v206
  %210 = vrot.lane.b32.xlu0 %v208, 32
  %v211 = vpop.permute.xlu0 %210
  %v213 = vadd.f32 %v203, %v211
  %v214 = vtanh.pop %v213
  %216 = vrot.lane.b32.xlu0 %v214, 64
  %v217 = vpop.permute.xlu0 %216
  %v219 = vmul.f32 %v201, %v217
  %221 = vrot.lane.b32.xlu0 %v219, 32
  %v222 = vpop.permute.xlu0 %221
  %v223 = vsel %vm36, %v222, 0
  %225 = vmatprep.subr.mxu0 0.0
  %226 = vmatpush1.msra.mxu0 %v118
  %227 = vmatprep.subr.mxu0 0.0
  %228 = vmatpush1.msra.mxu0 %v119
  %229 = vmatprep.subr.mxu0 0.0
  %230 = vmatpush1.msra.mxu0 %v120
  %231 = vmatprep.subr.mxu0 0.0
  %232 = vmatpush1.msra.mxu0 %v121
  %233 = vmatprep.subr.mxu0 0.0
  %234 = vmatpush1.msra.mxu0 0.0
  %235 = vmatprep.subr.mxu0 0.0
  %236 = vmatpush1.msra.mxu0 0.0
  %237 = vmatprep.subr.mxu0 0.0
  %238 = vmatpush1.msra.mxu0 0.0
  %239 = vmatprep.subr.mxu0 0.0
  %240 = vmatpush1.msra.mxu0 0.0
  %241 = vmatprep.subr.mxu0 0.0
  %242 = vmatpush1.msra.mxu0 0.0
  %243 = vmatprep.subr.mxu0 0.0
  %244 = vmatpush1.msra.mxu0 0.0
  %245 = vmatprep.subr.mxu0 0.0
  %246 = vmatpush1.msra.mxu0 0.0
  %247 = vmatprep.subr.mxu0 0.0
  %248 = vmatpush1.msra.mxu0 0.0
  %249 = vmatprep.subr.mxu0 0.0
  %250 = vmatpush1.msra.mxu0 0.0
  %251 = vmatprep.subr.mxu0 0.0
  %252 = vmatpush1.msra.mxu0 0.0
  %253 = vmatprep.subr.mxu0 0.0
  %254 = vmatpush1.msra.mxu0 0.0
  %255 = vmatprep.subr.mxu0 0.0
  %256 = vmatpush1.msra.mxu0 0.0
  %257 = vmatprep.subr.mxu0 0.0
  %258 = vmatpush1.msra.mxu0 0.0
  %259 = vmatprep.subr.mxu0 0.0
  %260 = vmatpush1.msra.mxu0 0.0
  %261 = vmatprep.subr.mxu0 0.0
  %262 = vmatpush1.msra.mxu0 0.0
  %263 = vmatprep.subr.mxu0 0.0
  %264 = vmatpush1.msra.mxu0 0.0
  %265 = vmatprep.subr.mxu0 0.0
  %266 = vmatpush1.msra.mxu0 0.0
  %267 = vmatprep.subr.mxu0 0.0
  %268 = vmatpush1.msra.mxu0 0.0
  %269 = vmatprep.subr.mxu0 0.0
  %270 = vmatpush1.msra.mxu0 0.0
  %271 = vmatprep.subr.mxu0 0.0
  %272 = vmatpush1.msra.mxu0 0.0
  %273 = vmatprep.subr.mxu0 0.0
  %274 = vmatpush1.msra.mxu0 0.0
  %275 = vmatprep.subr.mxu0 0.0
  %276 = vmatpush1.msra.mxu0 0.0
  %277 = vmatprep.subr.mxu0 0.0
  %278 = vmatpush1.msra.mxu0 0.0
  %279 = vmatprep.subr.mxu0 0.0
  %280 = vmatpush1.msra.mxu0 0.0
  %281 = vmatprep.subr.mxu0 0.0
  %282 = vmatpush1.msra.mxu0 0.0
  %283 = vmatprep.subr.mxu0 0.0
  %284 = vmatpush1.msra.mxu0 0.0
  %285 = vmatprep.subr.mxu0 0.0
  %286 = vmatpush1.msra.mxu0 0.0
  %287 = vmatprep.subr.mxu0 0.0
  %288 = vmatpush1.msra.mxu0 0.0
  %289 = vmatprep.mubr.f32.mxu0 0.0
  %290 = vmatmul.mubr.f32.gmra.mrb[0].mxu0 %v223
  %v291 = vpop.f32.mrb[0].mxu0
  %v292 = vadd.f32 0.0, %v291
  %v293 = vpop.f32.mrb[0].mxu0
  %294 = vdwg.mxu0
  %v296 = vrot.slane %v292, 6
  %v298 = vadd.f32 %v110, %v296
  %v299 = vxor.u32 %v298, 2147483648
  %v300 = vmul.f32 %v299, 1.442695
  %v301 = vpow.pop %v300
  %v302 = vadd.f32 %v301, 1.0
  %v303 = vrcp.pop %v302
  %v304 = vmul.f32 1.0, %v303
  %v305 = vtanh.pop %v298
  %v307 = vrot.slane %v213, 6
  %v309 = vmul.f32 %v304, %v307
  %311 = vrot.lane.b32.xlu0 %v305, 64
  %v312 = vpop.permute.xlu0 %311
  %v314 = vmul.f32 %v304, %v312
  %316 = vrot.lane.b32.xlu0 %v314, 32
  %v317 = vpop.permute.xlu0 %316
  %v319 = vadd.f32 %v309, %v317
  %v320 = vtanh.pop %v319
  %322 = vrot.lane.b32.xlu0 %v320, 64
  %v323 = vpop.permute.xlu0 %322
  %v325 = vmul.f32 %v304, %v323
  %v327 = vrot.slane %v325, 2
  %328 = vrot.lane.b32.xlu0 %v327, 32
  %v329 = vpop.permute.xlu0 %328
  %v330 = vsel %vm36, %v329, 0
  %332 = vmatprep.subr.mxu0 0.0
  %333 = vmatpush1.msra.mxu0 %v118
  %334 = vmatprep.subr.mxu0 0.0
  %335 = vmatpush1.msra.mxu0 %v119
  %336 = vmatprep.subr.mxu0 0.0
  %337 = vmatpush1.msra.mxu0 %v120
  %338 = vmatprep.subr.mxu0 0.0
  %339 = vmatpush1.msra.mxu0 %v121
  %340 = vmatprep.subr.mxu0 0.0
  %341 = vmatpush1.msra.mxu0 0.0
  %342 = vmatprep.subr.mxu0 0.0
  %343 = vmatpush1.msra.mxu0 0.0
  %344 = vmatprep.subr.mxu0 0.0
  %345 = vmatpush1.msra.mxu0 0.0
  %346 = vmatprep.subr.mxu0 0.0
  %347 = vmatpush1.msra.mxu0 0.0
  %348 = vmatprep.subr.mxu0 0.0
  %349 = vmatpush1.msra.mxu0 0.0
  %350 = vmatprep.subr.mxu0 0.0
  %351 = vmatpush1.msra.mxu0 0.0
  %352 = vmatprep.subr.mxu0 0.0
  %353 = vmatpush1.msra.mxu0 0.0
  %354 = vmatprep.subr.mxu0 0.0
  %355 = vmatpush1.msra.mxu0 0.0
  %356 = vmatprep.subr.mxu0 0.0
  %357 = vmatpush1.msra.mxu0 0.0
  %358 = vmatprep.subr.mxu0 0.0
  %359 = vmatpush1.msra.mxu0 0.0
  %360 = vmatprep.subr.mxu0 0.0
  %361 = vmatpush1.msra.mxu0 0.0
  %362 = vmatprep.subr.mxu0 0.0
  %363 = vmatpush1.msra.mxu0 0.0
  %364 = vmatprep.subr.mxu0 0.0
  %365 = vmatpush1.msra.mxu0 0.0
  %366 = vmatprep.subr.mxu0 0.0
  %367 = vmatpush1.msra.mxu0 0.0
  %368 = vmatprep.subr.mxu0 0.0
  %369 = vmatpush1.msra.mxu0 0.0
  %370 = vmatprep.subr.mxu0 0.0
  %371 = vmatpush1.msra.mxu0 0.0
  %372 = vmatprep.subr.mxu0 0.0
  %373 = vmatpush1.msra.mxu0 0.0
  %374 = vmatprep.subr.mxu0 0.0
  %375 = vmatpush1.msra.mxu0 0.0
  %376 = vmatprep.subr.mxu0 0.0
  %377 = vmatpush1.msra.mxu0 0.0
  %378 = vmatprep.subr.mxu0 0.0
  %379 = vmatpush1.msra.mxu0 0.0
  %380 = vmatprep.subr.mxu0 0.0
  %381 = vmatpush1.msra.mxu0 0.0
  %382 = vmatprep.subr.mxu0 0.0
  %383 = vmatpush1.msra.mxu0 0.0
  %384 = vmatprep.subr.mxu0 0.0
  %385 = vmatpush1.msra.mxu0 0.0
  %386 = vmatprep.subr.mxu0 0.0
  %387 = vmatpush1.msra.mxu0 0.0
  %388 = vmatprep.subr.mxu0 0.0
  %389 = vmatpush1.msra.mxu0 0.0
  %390 = vmatprep.subr.mxu0 0.0
  %391 = vmatpush1.msra.mxu0 0.0
  %392 = vmatprep.subr.mxu0 0.0
  %393 = vmatpush1.msra.mxu0 0.0
  %394 = vmatprep.subr.mxu0 0.0
  %395 = vmatpush1.msra.mxu0 0.0
  %396 = vmatprep.mubr.f32.mxu0 0.0
  %397 = vmatmul.mubr.f32.gmra.mrb[0].mxu0 %v330
  %v398 = vpop.f32.mrb[0].mxu0
  %v399 = vadd.f32 0.0, %v398
  %v400 = vpop.f32.mrb[0].mxu0
  %401 = vdwg.mxu0
  %v403 = vrot.slane %v399, 4
  %v405 = vadd.f32 %v110, %v403
  %v406 = vxor.u32 %v405, 2147483648
  %v407 = vmul.f32 %v406, 1.442695
  %v408 = vpow.pop %v407
  %v409 = vadd.f32 %v408, 1.0
  %v410 = vrcp.pop %v409
  %v411 = vmul.f32 1.0, %v410
  %v412 = vtanh.pop %v405
  %v414 = vrot.slane %v319, 6
  %v416 = vmul.f32 %v411, %v414
  %418 = vrot.lane.b32.xlu0 %v412, 64
  %v419 = vpop.permute.xlu0 %418
  %v421 = vmul.f32 %v411, %v419
  %423 = vrot.lane.b32.xlu0 %v421, 32
  %v424 = vpop.permute.xlu0 %423
  %v426 = vadd.f32 %v416, %v424
  %v427 = vtanh.pop %v426
  %429 = vrot.lane.b32.xlu0 %v427, 64
  %v430 = vpop.permute.xlu0 %429
  %v432 = vmul.f32 %v411, %v430
  %v434 = vrot.slane %v432, 4
  %435 = vrot.lane.b32.xlu0 %v434, 32
  %v436 = vpop.permute.xlu0 %435
  %v437 = vsel %vm36, %v436, 0
  %439 = vmatprep.subr.mxu0 0.0
  %440 = vmatpush1.msra.mxu0 %v118
  %441 = vmatprep.subr.mxu0 0.0
  %442 = vmatpush1.msra.mxu0 %v119
  %443 = vmatprep.subr.mxu0 0.0
  %444 = vmatpush1.msra.mxu0 %v120
  %445 = vmatprep.subr.mxu0 0.0
  %446 = vmatpush1.msra.mxu0 %v121
  %447 = vmatprep.subr.mxu0 0.0
  %448 = vmatpush1.msra.mxu0 0.0
  %449 = vmatprep.subr.mxu0 0.0
  %450 = vmatpush1.msra.mxu0 0.0
  %451 = vmatprep.subr.mxu0 0.0
  %452 = vmatpush1.msra.mxu0 0.0
  %453 = vmatprep.subr.mxu0 0.0
  %454 = vmatpush1.msra.mxu0 0.0
  %455 = vmatprep.subr.mxu0 0.0
  %456 = vmatpush1.msra.mxu0 0.0
  %457 = vmatprep.subr.mxu0 0.0
  %458 = vmatpush1.msra.mxu0 0.0
  %459 = vmatprep.subr.mxu0 0.0
  %460 = vmatpush1.msra.mxu0 0.0
  %461 = vmatprep.subr.mxu0 0.0
  %462 = vmatpush1.msra.mxu0 0.0
  %463 = vmatprep.subr.mxu0 0.0
  %464 = vmatpush1.msra.mxu0 0.0
  %465 = vmatprep.subr.mxu0 0.0
  %466 = vmatpush1.msra.mxu0 0.0
  %467 = vmatprep.subr.mxu0 0.0
  %468 = vmatpush1.msra.mxu0 0.0
  %469 = vmatprep.subr.mxu0 0.0
  %470 = vmatpush1.msra.mxu0 0.0
  %471 = vmatprep.subr.mxu0 0.0
  %472 = vmatpush1.msra.mxu0 0.0
  %473 = vmatprep.subr.mxu0 0.0
  %474 = vmatpush1.msra.mxu0 0.0
  %475 = vmatprep.subr.mxu0 0.0
  %476 = vmatpush1.msra.mxu0 0.0
  %477 = vmatprep.subr.mxu0 0.0
  %478 = vmatpush1.msra.mxu0 0.0
  %479 = vmatprep.subr.mxu0 0.0
  %480 = vmatpush1.msra.mxu0 0.0
  %481 = vmatprep.subr.mxu0 0.0
  %482 = vmatpush1.msra.mxu0 0.0
  %483 = vmatprep.subr.mxu0 0.0
  %484 = vmatpush1.msra.mxu0 0.0
  %485 = vmatprep.subr.mxu0 0.0
  %486 = vmatpush1.msra.mxu0 0.0
  %487 = vmatprep.subr.mxu0 0.0
  %488 = vmatpush1.msra.mxu0 0.0
  %489 = vmatprep.subr.mxu0 0.0
  %490 = vmatpush1.msra.mxu0 0.0
  %491 = vmatprep.subr.mxu0 0.0
  %492 = vmatpush1.msra.mxu0 0.0
  %493 = vmatprep.subr.mxu0 0.0
  %494 = vmatpush1.msra.mxu0 0.0
  %495 = vmatprep.subr.mxu0 0.0
  %496 = vmatpush1.msra.mxu0 0.0
  %497 = vmatprep.subr.mxu0 0.0
  %498 = vmatpush1.msra.mxu0 0.0
  %499 = vmatprep.subr.mxu0 0.0
  %500 = vmatpush1.msra.mxu0 0.0
  %501 = vmatprep.subr.mxu0 0.0
  %502 = vmatpush1.msra.mxu0 0.0
  %503 = vmatprep.mubr.f32.mxu0 0.0
  %504 = vmatmul.mubr.f32.gmra.mrb[0].mxu0 %v437
  %v505 = vpop.f32.mrb[0].mxu0
  %v506 = vadd.f32 0.0, %v505
  %v507 = vpop.f32.mrb[0].mxu0
  %508 = vdwg.mxu0
  %v510 = vrot.slane %v506, 2
  %v512 = vadd.f32 %v110, %v510
  %v513 = vxor.u32 %v512, 2147483648
  %v514 = vmul.f32 %v513, 1.442695
  %v515 = vpow.pop %v514
  %v516 = vadd.f32 %v515, 1.0
  %v517 = vrcp.pop %v516
  %v518 = vmul.f32 1.0, %v517
  %v519 = vtanh.pop %v512
  %v521 = vrot.slane %v426, 6
  %v523 = vmul.f32 %v518, %v521
  %525 = vrot.lane.b32.xlu0 %v519, 64
  %v526 = vpop.permute.xlu0 %525
  %v528 = vmul.f32 %v518, %v526
  %530 = vrot.lane.b32.xlu0 %v528, 32
  %v531 = vpop.permute.xlu0 %530
  %v533 = vadd.f32 %v523, %v531
  %v534 = vtanh.pop %v533
  %536 = vrot.lane.b32.xlu0 %v534, 64
  %v537 = vpop.permute.xlu0 %536
  %v539 = vmul.f32 %v518, %v537
  %v541 = vrot.slane %v539, 6
  %542 = vrot.lane.b32.xlu0 %v541, 32
  %v543 = vpop.permute.xlu0 %542
  %v544 = vsel %vm36, %v543, 0
  %546 = vmatprep.subr.mxu0 0.0
  %547 = vmatpush1.msra.mxu0 %v118
  %548 = vmatprep.subr.mxu0 0.0
  %549 = vmatpush1.msra.mxu0 %v119
  %550 = vmatprep.subr.mxu0 0.0
  %551 = vmatpush1.msra.mxu0 %v120
  %552 = vmatprep.subr.mxu0 0.0
  %553 = vmatpush1.msra.mxu0 %v121
  %554 = vmatprep.subr.mxu0 0.0
  %555 = vmatpush1.msra.mxu0 0.0
  %556 = vmatprep.subr.mxu0 0.0
  %557 = vmatpush1.msra.mxu0 0.0
  %558 = vmatprep.subr.mxu0 0.0
  %559 = vmatpush1.msra.mxu0 0.0
  %560 = vmatprep.subr.mxu0 0.0
  %561 = vmatpush1.msra.mxu0 0.0
  %562 = vmatprep.subr.mxu0 0.0
  %563 = vmatpush1.msra.mxu0 0.0
  %564 = vmatprep.subr.mxu0 0.0
  %565 = vmatpush1.msra.mxu0 0.0
  %566 = vmatprep.subr.mxu0 0.0
  %567 = vmatpush1.msra.mxu0 0.0
  %568 = vmatprep.subr.mxu0 0.0
  %569 = vmatpush1.msra.mxu0 0.0
  %570 = vmatprep.subr.mxu0 0.0
  %571 = vmatpush1.msra.mxu0 0.0
  %572 = vmatprep.subr.mxu0 0.0
  %573 = vmatpush1.msra.mxu0 0.0
  %574 = vmatprep.subr.mxu0 0.0
  %575 = vmatpush1.msra.mxu0 0.0
  %576 = vmatprep.subr.mxu0 0.0
  %577 = vmatpush1.msra.mxu0 0.0
  %578 = vmatprep.subr.mxu0 0.0
  %579 = vmatpush1.msra.mxu0 0.0
  %580 = vmatprep.subr.mxu0 0.0
  %581 = vmatpush1.msra.mxu0 0.0
  %582 = vmatprep.subr.mxu0 0.0
  %583 = vmatpush1.msra.mxu0 0.0
  %584 = vmatprep.subr.mxu0 0.0
  %585 = vmatpush1.msra.mxu0 0.0
  %586 = vmatprep.subr.mxu0 0.0
  %587 = vmatpush1.msra.mxu0 0.0
  %588 = vmatprep.subr.mxu0 0.0
  %589 = vmatpush1.msra.mxu0 0.0
  %590 = vmatprep.subr.mxu0 0.0
  %591 = vmatpush1.msra.mxu0 0.0
  %592 = vmatprep.subr.mxu0 0.0
  %593 = vmatpush1.msra.mxu0 0.0
  %594 = vmatprep.subr.mxu0 0.0
  %595 = vmatpush1.msra.mxu0 0.0
  %596 = vmatprep.subr.mxu0 0.0
  %597 = vmatpush1.msra.mxu0 0.0
  %598 = vmatprep.subr.mxu0 0.0
  %599 = vmatpush1.msra.mxu0 0.0
  %600 = vmatprep.subr.mxu0 0.0
  %601 = vmatpush1.msra.mxu0 0.0
  %602 = vmatprep.subr.mxu0 0.0
  %603 = vmatpush1.msra.mxu0 0.0
  %604 = vmatprep.subr.mxu0 0.0
  %605 = vmatpush1.msra.mxu0 0.0
  %606 = vmatprep.subr.mxu0 0.0
  %607 = vmatpush1.msra.mxu0 0.0
  %608 = vmatprep.subr.mxu0 0.0
  %609 = vmatpush1.msra.mxu0 0.0
  %610 = vmatprep.mubr.f32.mxu0 0.0
  %611 = vmatmul.mubr.f32.gmra.mrb[0].mxu0 %v544
  %v612 = vpop.f32.mrb[0].mxu0
  %v613 = vadd.f32 0.0, %v612
  %v614 = vpop.f32.mrb[0].mxu0
  %615 = vdwg.mxu0
  %v616 = vadd.f32 %v115, %v613
  %v617 = vxor.u32 %v616, 2147483648
  %v618 = vmul.f32 %v617, 1.442695
  %v619 = vpow.pop %v618
  %v620 = vadd.f32 %v619, 1.0
  %v621 = vrcp.pop %v620
  %v622 = vmul.f32 1.0, %v621
  %v623 = vtanh.pop %v616
  %v625 = vrot.slane %v533, 6
  %v627 = vmul.f32 %v622, %v625
  %629 = vrot.lane.b32.xlu0 %v623, 64
  %v630 = vpop.permute.xlu0 %629
  %v632 = vmul.f32 %v622, %v630
  %634 = vrot.lane.b32.xlu0 %v632, 32
  %v635 = vpop.permute.xlu0 %634
  %v637 = vadd.f32 %v627, %v635
  %v638 = vtanh.pop %v637
  %640 = vrot.lane.b32.xlu0 %v638, 64
  %v641 = vpop.permute.xlu0 %640
  %v643 = vmul.f32 %v622, %v641
  %645 = vrot.lane.b32.xlu0 %v643, 32
  %v646 = vpop.permute.xlu0 %645
  %v647 = vsel %vm36, %v646, 0
  %649 = vmatprep.subr.mxu0 0.0
  %650 = vmatpush1.msra.mxu0 %v118
  %651 = vmatprep.subr.mxu0 0.0
  %652 = vmatpush1.msra.mxu0 %v119
  %653 = vmatprep.subr.mxu0 0.0
  %654 = vmatpush1.msra.mxu0 %v120
  %655 = vmatprep.subr.mxu0 0.0
  %656 = vmatpush1.msra.mxu0 %v121
  %657 = vmatprep.subr.mxu0 0.0
  %658 = vmatpush1.msra.mxu0 0.0
  %659 = vmatprep.subr.mxu0 0.0
  %660 = vmatpush1.msra.mxu0 0.0
  %661 = vmatprep.subr.mxu0 0.0
  %662 = vmatpush1.msra.mxu0 0.0
  %663 = vmatprep.subr.mxu0 0.0
  %664 = vmatpush1.msra.mxu0 0.0
  %665 = vmatprep.subr.mxu0 0.0
  %666 = vmatpush1.msra.mxu0 0.0
  %667 = vmatprep.subr.mxu0 0.0
  %668 = vmatpush1.msra.mxu0 0.0
  %669 = vmatprep.subr.mxu0 0.0
  %670 = vmatpush1.msra.mxu0 0.0
  %671 = vmatprep.subr.mxu0 0.0
  %672 = vmatpush1.msra.mxu0 0.0
  %673 = vmatprep.subr.mxu0 0.0
  %674 = vmatpush1.msra.mxu0 0.0
  %675 = vmatprep.subr.mxu0 0.0
  %676 = vmatpush1.msra.mxu0 0.0
  %677 = vmatprep.subr.mxu0 0.0
  %678 = vmatpush1.msra.mxu0 0.0
  %679 = vmatprep.subr.mxu0 0.0
  %680 = vmatpush1.msra.mxu0 0.0
  %681 = vmatprep.subr.mxu0 0.0
  %682 = vmatpush1.msra.mxu0 0.0
  %683 = vmatprep.subr.mxu0 0.0
  %684 = vmatpush1.msra.mxu0 0.0
  %685 = vmatprep.subr.mxu0 0.0
  %686 = vmatpush1.msra.mxu0 0.0
  %687 = vmatprep.subr.mxu0 0.0
  %688 = vmatpush1.msra.mxu0 0.0
  %689 = vmatprep.subr.mxu0 0.0
  %690 = vmatpush1.msra.mxu0 0.0
  %691 = vmatprep.subr.mxu0 0.0
  %692 = vmatpush1.msra.mxu0 0.0
  %693 = vmatprep.subr.mxu0 0.0
  %694 = vmatpush1.msra.mxu0 0.0
  %695 = vmatprep.subr.mxu0 0.0
  %696 = vmatpush1.msra.mxu0 0.0
  %697 = vmatprep.subr.mxu0 0.0
  %698 = vmatpush1.msra.mxu0 0.0
  %699 = vmatprep.subr.mxu0 0.0
  %700 = vmatpush1.msra.mxu0 0.0
  %701 = vmatprep.subr.mxu0 0.0
  %702 = vmatpush1.msra.mxu0 0.0
  %703 = vmatprep.subr.mxu0 0.0
  %704 = vmatpush1.msra.mxu0 0.0
  %705 = vmatprep.subr.mxu0 0.0
  %706 = vmatpush1.msra.mxu0 0.0
  %707 = vmatprep.subr.mxu0 0.0
  %708 = vmatpush1.msra.mxu0 0.0
  %709 = vmatprep.subr.mxu0 0.0
  %710 = vmatpush1.msra.mxu0 0.0
  %711 = vmatprep.subr.mxu0 0.0
  %712 = vmatpush1.msra.mxu0 0.0
  %713 = vmatprep.mubr.f32.mxu0 0.0
  %714 = vmatmul.mubr.f32.gmra.mrb[0].mxu0 %v647
  %v715 = vpop.f32.mrb[0].mxu0
  %v716 = vadd.f32 0.0, %v715
  %v717 = vpop.f32.mrb[0].mxu0
  %718 = vdwg.mxu0
  %v720 = vrot.slane %v716, 6
  %v722 = vadd.f32 %v115, %v720
  %v723 = vxor.u32 %v722, 2147483648
  %v724 = vmul.f32 %v723, 1.442695
  %v725 = vpow.pop %v724
  %v726 = vadd.f32 %v725, 1.0
  %v727 = vrcp.pop %v726
  %v728 = vmul.f32 1.0, %v727
  %v729 = vtanh.pop %v722
  %v731 = vrot.slane %v637, 6
  %v733 = vmul.f32 %v728, %v731
  %735 = vrot.lane.b32.xlu0 %v729, 64
  %v736 = vpop.permute.xlu0 %735
  %v738 = vmul.f32 %v728, %v736
  %740 = vrot.lane.b32.xlu0 %v738, 32
  %v741 = vpop.permute.xlu0 %740
  %v743 = vadd.f32 %v733, %v741
  %v744 = vtanh.pop %v743
  %746 = vrot.lane.b32.xlu0 %v744, 64
  %v747 = vpop.permute.xlu0 %746
  %v749 = vmul.f32 %v728, %v747
  %v751 = vrot.slane %v749, 2
  %752 = vrot.lane.b32.xlu0 %v751, 32
  %v753 = vpop.permute.xlu0 %752
  %v754 = vsel %vm36, %v753, 0
  %756 = vmatprep.subr.mxu0 0.0
  %757 = vmatpush1.msra.mxu0 %v118
  %758 = vmatprep.subr.mxu0 0.0
  %759 = vmatpush1.msra.mxu0 %v119
  %760 = vmatprep.subr.mxu0 0.0
  %761 = vmatpush1.msra.mxu0 %v120
  %762 = vmatprep.subr.mxu0 0.0
  %763 = vmatpush1.msra.mxu0 %v121
  %764 = vmatprep.subr.mxu0 0.0
  %765 = vmatpush1.msra.mxu0 0.0
  %766 = vmatprep.subr.mxu0 0.0
  %767 = vmatpush1.msra.mxu0 0.0
  %768 = vmatprep.subr.mxu0 0.0
  %769 = vmatpush1.msra.mxu0 0.0
  %770 = vmatprep.subr.mxu0 0.0
  %771 = vmatpush1.msra.mxu0 0.0
  %772 = vmatprep.subr.mxu0 0.0
  %773 = vmatpush1.msra.mxu0 0.0
  %774 = vmatprep.subr.mxu0 0.0
  %775 = vmatpush1.msra.mxu0 0.0
  %776 = vmatprep.subr.mxu0 0.0
  %777 = vmatpush1.msra.mxu0 0.0
  %778 = vmatprep.subr.mxu0 0.0
  %779 = vmatpush1.msra.mxu0 0.0
  %780 = vmatprep.subr.mxu0 0.0
  %781 = vmatpush1.msra.mxu0 0.0
  %782 = vmatprep.subr.mxu0 0.0
  %783 = vmatpush1.msra.mxu0 0.0
  %784 = vmatprep.subr.mxu0 0.0
  %785 = vmatpush1.msra.mxu0 0.0
  %786 = vmatprep.subr.mxu0 0.0
  %787 = vmatpush1.msra.mxu0 0.0
  %788 = vmatprep.subr.mxu0 0.0
  %789 = vmatpush1.msra.mxu0 0.0
  %790 = vmatprep.subr.mxu0 0.0
  %791 = vmatpush1.msra.mxu0 0.0
  %792 = vmatprep.subr.mxu0 0.0
  %793 = vmatpush1.msra.mxu0 0.0
  %794 = vmatprep.subr.mxu0 0.0
  %795 = vmatpush1.msra.mxu0 0.0
  %796 = vmatprep.subr.mxu0 0.0
  %797 = vmatpush1.msra.mxu0 0.0
  %798 = vmatprep.subr.mxu0 0.0
  %799 = vmatpush1.msra.mxu0 0.0
  %800 = vmatprep.subr.mxu0 0.0
  %801 = vmatpush1.msra.mxu0 0.0
  %802 = vmatprep.subr.mxu0 0.0
  %803 = vmatpush1.msra.mxu0 0.0
  %804 = vmatprep.subr.mxu0 0.0
  %805 = vmatpush1.msra.mxu0 0.0
  %806 = vmatprep.subr.mxu0 0.0
  %807 = vmatpush1.msra.mxu0 0.0
  %808 = vmatprep.subr.mxu0 0.0
  %809 = vmatpush1.msra.mxu0 0.0
  %810 = vmatprep.subr.mxu0 0.0
  %811 = vmatpush1.msra.mxu0 0.0
  %812 = vmatprep.subr.mxu0 0.0
  %813 = vmatpush1.msra.mxu0 0.0
  %814 = vmatprep.subr.mxu0 0.0
  %815 = vmatpush1.msra.mxu0 0.0
  %816 = vmatprep.subr.mxu0 0.0
  %817 = vmatpush1.msra.mxu0 0.0
  %818 = vmatprep.subr.mxu0 0.0
  %819 = vmatpush1.msra.mxu0 0.0
  %820 = vmatprep.mubr.f32.mxu0 0.0
  %821 = vmatmul.mubr.f32.gmra.mrb[0].mxu0 %v754
  %v822 = vpop.f32.mrb[0].mxu0
  %v823 = vadd.f32 0.0, %v822
  %v824 = vpop.f32.mrb[0].mxu0
  %825 = vdwg.mxu0
  %v827 = vrot.slane %v823, 4
  %v829 = vadd.f32 %v115, %v827
  %v830 = vxor.u32 %v829, 2147483648
  %v831 = vmul.f32 %v830, 1.442695
  %v832 = vpow.pop %v831
  %v833 = vadd.f32 %v832, 1.0
  %v834 = vrcp.pop %v833
  %v835 = vmul.f32 1.0, %v834
  %v836 = vtanh.pop %v829
  %v838 = vrot.slane %v743, 6
  %v840 = vmul.f32 %v835, %v838
  %842 = vrot.lane.b32.xlu0 %v836, 64
  %v843 = vpop.permute.xlu0 %842
  %v845 = vmul.f32 %v835, %v843
  %847 = vrot.lane.b32.xlu0 %v845, 32
  %v848 = vpop.permute.xlu0 %847
  %v850 = vadd.f32 %v840, %v848
  %v851 = vtanh.pop %v850
  %853 = vrot.lane.b32.xlu0 %v851, 64
  %v854 = vpop.permute.xlu0 %853
  %v856 = vmul.f32 %v835, %v854
  %v858 = vrot.slane %v856, 4
  %859 = vrot.lane.b32.xlu0 %v858, 32
  %v860 = vpop.permute.xlu0 %859
  %v861 = vsel %vm36, %v860, 0
  %863 = vmatprep.subr.mxu0 0.0
  %864 = vmatpush1.msra.mxu0 %v118
  %865 = vmatprep.subr.mxu0 0.0
  %866 = vmatpush1.msra.mxu0 %v119
  %867 = vmatprep.subr.mxu0 0.0
  %868 = vmatpush1.msra.mxu0 %v120
  %869 = vmatprep.subr.mxu0 0.0
  %870 = vmatpush1.msra.mxu0 %v121
  %871 = vmatprep.subr.mxu0 0.0
  %872 = vmatpush1.msra.mxu0 0.0
  %873 = vmatprep.subr.mxu0 0.0
  %874 = vmatpush1.msra.mxu0 0.0
  %875 = vmatprep.subr.mxu0 0.0
  %876 = vmatpush1.msra.mxu0 0.0
  %877 = vmatprep.subr.mxu0 0.0
  %878 = vmatpush1.msra.mxu0 0.0
  %879 = vmatprep.subr.mxu0 0.0
  %880 = vmatpush1.msra.mxu0 0.0
  %881 = vmatprep.subr.mxu0 0.0
  %882 = vmatpush1.msra.mxu0 0.0
  %883 = vmatprep.subr.mxu0 0.0
  %884 = vmatpush1.msra.mxu0 0.0
  %885 = vmatprep.subr.mxu0 0.0
  %886 = vmatpush1.msra.mxu0 0.0
  %887 = vmatprep.subr.mxu0 0.0
  %888 = vmatpush1.msra.mxu0 0.0
  %889 = vmatprep.subr.mxu0 0.0
  %890 = vmatpush1.msra.mxu0 0.0
  %891 = vmatprep.subr.mxu0 0.0
  %892 = vmatpush1.msra.mxu0 0.0
  %893 = vmatprep.subr.mxu0 0.0
  %894 = vmatpush1.msra.mxu0 0.0
  %895 = vmatprep.subr.mxu0 0.0
  %896 = vmatpush1.msra.mxu0 0.0
  %897 = vmatprep.subr.mxu0 0.0
  %898 = vmatpush1.msra.mxu0 0.0
  %899 = vmatprep.subr.mxu0 0.0
  %900 = vmatpush1.msra.mxu0 0.0
  %901 = vmatprep.subr.mxu0 0.0
  %902 = vmatpush1.msra.mxu0 0.0
  %903 = vmatprep.subr.mxu0 0.0
  %904 = vmatpush1.msra.mxu0 0.0
  %905 = vmatprep.subr.mxu0 0.0
  %906 = vmatpush1.msra.mxu0 0.0
  %907 = vmatprep.subr.mxu0 0.0
  %908 = vmatpush1.msra.mxu0 0.0
  %909 = vmatprep.subr.mxu0 0.0
  %910 = vmatpush1.msra.mxu0 0.0
  %911 = vmatprep.subr.mxu0 0.0
  %912 = vmatpush1.msra.mxu0 0.0
  %913 = vmatprep.subr.mxu0 0.0
  %914 = vmatpush1.msra.mxu0 0.0
  %915 = vmatprep.subr.mxu0 0.0
  %916 = vmatpush1.msra.mxu0 0.0
  %917 = vmatprep.subr.mxu0 0.0
  %918 = vmatpush1.msra.mxu0 0.0
  %919 = vmatprep.subr.mxu0 0.0
  %920 = vmatpush1.msra.mxu0 0.0
  %921 = vmatprep.subr.mxu0 0.0
  %922 = vmatpush1.msra.mxu0 0.0
  %923 = vmatprep.subr.mxu0 0.0
  %924 = vmatpush1.msra.mxu0 0.0
  %925 = vmatprep.subr.mxu0 0.0
  %926 = vmatpush1.msra.mxu0 0.0
  %927 = vmatprep.mubr.f32.mxu0 0.0
  %928 = vmatmul.mubr.f32.gmra.mrb[0].mxu0 %v861
  %v929 = vpop.f32.mrb[0].mxu0
  %v930 = vadd.f32 0.0, %v929
  %v931 = vpop.f32.mrb[0].mxu0
  %932 = vdwg.mxu0
  %v934 = vrot.slane %v930, 2
  %v936 = vadd.f32 %v115, %v934
  %v937 = vxor.u32 %v936, 2147483648
  %v938 = vmul.f32 %v937, 1.442695
  %v939 = vpow.pop %v938
  %v940 = vadd.f32 %v939, 1.0
  %v941 = vrcp.pop %v940
  %v942 = vmul.f32 1.0, %v941
  %v943 = vtanh.pop %v936
  %v945 = vrot.slane %v850, 6
  %v947 = vmul.f32 %v942, %v945
  %949 = vrot.lane.b32.xlu0 %v943, 64
  %v950 = vpop.permute.xlu0 %949
  %v952 = vmul.f32 %v942, %v950
  %954 = vrot.lane.b32.xlu0 %v952, 32
  %v955 = vpop.permute.xlu0 %954
  %v957 = vadd.f32 %v947, %v955
  %v958 = vtanh.pop %v957
  %960 = vrot.lane.b32.xlu0 %v958, 64
  %v961 = vpop.permute.xlu0 %960
  %v963 = vmul.f32 %v942, %v961
  %vm964 = vcmask 1041408
  %v965 = vsel %vm964, %v219, %v325
  %vm966 = vcmask 1043456
  %v967 = vsel %vm966, %v965, %v432
  %vm968 = vcmask 1045504
  %v969 = vsel %vm968, %v967, %v539
  %v970 = vsel %vm964, %v643, %v749
  %v971 = vsel %vm966, %v970, %v856
  %v972 = vsel %vm968, %v971, %v963
  %v973 = vld [vmem:[%s4] sm:$0xff]
  %v974 = vld [vmem:[%s4 + $0x8] sm:$0xff]
  %v975 = vld [vmem:[%s4 + $0x10] sm:$0xff]
  %v976 = vld [vmem:[%s4 + $0x18] sm:$0xff]
  %v977 = vld [vmem:[%s5] sm:$0x1]
  %v979 = vlaneseq
  %v980 = vshrl.u32 %v979, 7
  %v981 = vsub.s32 0, %v980
  %v982 = vrot.slane %v977, %v981
  %986 = vrot.lane.b32.xlu0 %v969, 32
  %v987 = vpop.permute.xlu0 %986
  %988 = vrot.lane.b32.xlu0 %v972, 32
  %v989 = vpop.permute.xlu0 %988
  %v990 = vsel %vm36, %v987, 0
  %v992 = vsel %vm36, %v989, 0
  %994 = vmatprep.subr.mxu0 0.0
  %995 = vmatpush1.msra.mxu0 %v973
  %996 = vmatprep.subr.mxu0 0.0
  %997 = vmatpush1.msra.mxu0 %v974
  %998 = vmatprep.subr.mxu0 0.0
  %999 = vmatpush1.msra.mxu0 %v975
  %1000 = vmatprep.subr.mxu0 0.0
  %1001 = vmatpush1.msra.mxu0 %v976
  %1002 = vmatprep.subr.mxu0 0.0
  %1003 = vmatpush1.msra.mxu0 0.0
  %1004 = vmatprep.subr.mxu0 0.0
  %1005 = vmatpush1.msra.mxu0 0.0
  %1006 = vmatprep.subr.mxu0 0.0
  %1007 = vmatpush1.msra.mxu0 0.0
  %1008 = vmatprep.subr.mxu0 0.0
  %1009 = vmatpush1.msra.mxu0 0.0
  %1010 = vmatprep.subr.mxu0 0.0
  %1011 = vmatpush1.msra.mxu0 0.0
  %1012 = vmatprep.subr.mxu0 0.0
  %1013 = vmatpush1.msra.mxu0 0.0
  %1014 = vmatprep.subr.mxu0 0.0
  %1015 = vmatpush1.msra.mxu0 0.0
  %1016 = vmatprep.subr.mxu0 0.0
  %1017 = vmatpush1.msra.mxu0 0.0
  %1018 = vmatprep.subr.mxu0 0.0
  %1019 = vmatpush1.msra.mxu0 0.0
  %1020 = vmatprep.subr.mxu0 0.0
  %1021 = vmatpush1.msra.mxu0 0.0
  %1022 = vmatprep.subr.mxu0 0.0
  %1023 = vmatpush1.msra.mxu0 0.0
  %1024 = vmatprep.subr.mxu0 0.0
  %1025 = vmatpush1.msra.mxu0 0.0
  %1026 = vmatprep.subr.mxu0 0.0
  %1027 = vmatpush1.msra.mxu0 0.0
  %1028 = vmatprep.subr.mxu0 0.0
  %1029 = vmatpush1.msra.mxu0 0.0
  %1030 = vmatprep.subr.mxu0 0.0
  %1031 = vmatpush1.msra.mxu0 0.0
  %1032 = vmatprep.subr.mxu0 0.0
  %1033 = vmatpush1.msra.mxu0 0.0
  %1034 = vmatprep.subr.mxu0 0.0
  %1035 = vmatpush1.msra.mxu0 0.0
  %1036 = vmatprep.subr.mxu0 0.0
  %1037 = vmatpush1.msra.mxu0 0.0
  %1038 = vmatprep.subr.mxu0 0.0
  %1039 = vmatpush1.msra.mxu0 0.0
  %1040 = vmatprep.subr.mxu0 0.0
  %1041 = vmatpush1.msra.mxu0 0.0
  %1042 = vmatprep.subr.mxu0 0.0
  %1043 = vmatpush1.msra.mxu0 0.0
  %1044 = vmatprep.subr.mxu0 0.0
  %1045 = vmatpush1.msra.mxu0 0.0
  %1046 = vmatprep.subr.mxu0 0.0
  %1047 = vmatpush1.msra.mxu0 0.0
  %1048 = vmatprep.subr.mxu0 0.0
  %1049 = vmatpush1.msra.mxu0 0.0
  %1050 = vmatprep.subr.mxu0 0.0
  %1051 = vmatpush1.msra.mxu0 0.0
  %1052 = vmatprep.subr.mxu0 0.0
  %1053 = vmatpush1.msra.mxu0 0.0
  %1054 = vmatprep.subr.mxu0 0.0
  %1055 = vmatpush1.msra.mxu0 0.0
  %1056 = vmatprep.subr.mxu0 0.0
  %1057 = vmatpush1.msra.mxu0 0.0
  %1058 = vmatprep.mubr.f32.mxu0 0.0
  %1059 = vmatmul.mubr.f32.gmra.mrb[0].mxu0 %v990
  %v1060 = vpop.f32.mrb[0].mxu0
  %v1061 = vadd.f32 %v982, %v1060
  %v1062 = vpop.f32.mrb[0].mxu0
  %1063 = vmatprep.mubr.f32.mxu0 0.0
  %1064 = vmatmul.mubr.f32.gmra.mrb[0].mxu0 %v992
  %v1065 = vpop.f32.mrb[0].mxu0
  %v1066 = vadd.f32 %v982, %v1065
  %v1067 = vpop.f32.mrb[0].mxu0
  %1068 = vdwg.mxu0
  %1069 = vst [vmem:[%s6] sm:$0xff] %v1061
  %1070 = vst [vmem:[%s6 + $0x8] sm:$0xff] %v1066
  // Predicated region
  $region26: #{decoder_forward.1} parent=0 // pred_check
    _
  $region27: #{decoder_forward.1} parent=0 // pred_check_branch
    %1072 = sbr.rel (0) target = $region29
  $region28: #{decoder_forward.1} parent=0 // pred_region
    _
  $region29: #{decoder_forward.1} parent=0 // pred_fallthru
    _
  // Predicated region
  $region30: #{decoder_forward.1} parent=0 // pred_check
    _
  $region31: #{decoder_forward.1} parent=0 // pred_check_branch
    %1074 = sbr.rel (0) target = $region33
  $region32: #{decoder_forward.1} parent=0 // pred_region
    _
  $region33: #{decoder_forward.1} parent=0 // pred_fallthru
    _

</llo_original>
